<compile_context>
chip_gen: v6e
topology: v6e:2x2x1
jax: 0.10.0
libtpu: 0.0.40
codegen_flags: <defaults>
</compile_context>

<pallas_src>
import functools

import jax
import jax.numpy as jnp
import numpy as np
from jax.experimental import pallas as pl
from jax.experimental.pallas import tpu as pltpu


def _gaussian_loss_kernel(yp_ref, yt_ref, out_ref, acc_ref, *,
                          eps, b_total, hw_total, mask_b, mask_hw):
    i = pl.program_id(0)           # batch tile   (parallel)
    j = pl.program_id(1)           # H*W tile     (reduction / arbitrary)
    n_j = pl.num_programs(1)

    @pl.when(j == 0)
    def _():
        acc_ref[...] = jnp.zeros_like(acc_ref)

    yp = yp_ref[...].astype(jnp.float32)     # (tile_b, C, tile_n)
    yt = yt_ref[...].astype(jnp.float32)

    # Numerically stable softmax over channels (sublane axis).
    m = jnp.max(yp, axis=1, keepdims=True)                 # (tile_b, 1, tile_n)
    e = jnp.exp(yp - m)                                    # 1 exp / element (EUP)
    s = jnp.sum(e, axis=1, keepdims=True)                  # (tile_b, 1, tile_n)
    p = e * pl.reciprocal(s, approx=False)                 # 1 recip / column + VPU mul
    # Exact log(p + eps) / log(1 - p + eps) kept (log-softmax rewrite would drop
    # the eps floor and change semantics for tiny p).
    term = yt * jnp.log(p + eps) + (1.0 - yt) * jnp.log(1.0 - p + eps)

    if mask_b or mask_hw:
        tile_b, _, tile_n = term.shape
        ok = None
        if mask_hw:
            hw_idx = jax.lax.broadcasted_iota(jnp.int32, term.shape, 2)
            ok = (hw_idx + j * tile_n) < hw_total
        if mask_b:
            b_idx = jax.lax.broadcasted_iota(jnp.int32, term.shape, 0)
            bm = (b_idx + i * tile_b) < b_total
            ok = bm if ok is None else (ok & bm)
        term = jnp.where(ok, term, 0.0)

    # Elementwise VPU accumulate; no per-step cross-lane reduce / SMEM RMW.
    acc_ref[...] += term

    @pl.when(j == n_j - 1)
    def _():
        partial = jnp.sum(acc_ref[...])    # single XLU reduce per batch tile
        out_ref[...] = jnp.broadcast_to(partial, out_ref.shape).astype(jnp.float32)


def gaussian_loss(y_pred, y_true, eps=1e-6, target_block_elems=1 << 20):
    """y_pred, y_true: (B, C, H, W) arrays. Returns scalar float32 loss."""
    B, C, H, W = y_pred.shape
    HW = H * W
    n_rows = B * HW                          # positions the reference averages over

    # NCHW -> (B, C, H*W): contiguous view, no transpose / extra HBM traffic.
    yp = y_pred.reshape(B, C, HW)
    yt = y_true.reshape(B, C, HW)

    # --- tile sizing --------------------------------------------------------
    per_b_elems = C * HW
    if per_b_elems <= target_block_elems:
        tile_n = HW                                   # full H*W on the lane axis
        tile_b = max(1, min(B, target_block_elems // per_b_elems))
        if B > 1:
            # Keep >= 2 batch tiles so the parallel grid axis can be split
            # across both TensorCores on v7x (no-op on single-TC v5e/v6e).
            tile_b = min(tile_b, pl.cdiv(B, 2))
    else:
        tile_b = 1
        tile_n = max(128, (target_block_elems // C) // 128 * 128)  # lane-aligned

    n_b = pl.cdiv(B, tile_b)
    n_hw = pl.cdiv(HW, tile_n)
    mask_b = (n_b * tile_b) != B
    mask_hw = (n_hw * tile_n) != HW

    block_bytes = tile_b * C * tile_n * 4
    # 2 inputs x 2 pipeline buffers + f32 accumulator + headroom; capped so it
    # also fits v7x's 64 MiB physical VMEM.
    vmem_limit = int(min(48 << 20, max(32 << 20, 5 * block_bytes + (4 << 20))))

    total_elems = B * C * HW
    cost = pl.CostEstimate(
        flops=12 * total_elems,
        transcendentals=3 * total_elems,
        bytes_accessed=2 * total_elems * 4 + n_b * 8 * 128 * 4,
    )

    kernel = functools.partial(
        _gaussian_loss_kernel, eps=eps, b_total=B, hw_total=HW,
        mask_b=mask_b, mask_hw=mask_hw)

    partials = pl.pallas_call(
        kernel,
        out_shape=jax.ShapeDtypeStruct((n_b, 8, 128), jnp.float32),
        grid_spec=pltpu.PrefetchScalarGridSpec(
            num_scalar_prefetch=0,
            grid=(n_b, n_hw),
            in_specs=[
                pl.BlockSpec((tile_b, C, tile_n), lambda i, j: (i, 0, j)),
                pl.BlockSpec((tile_b, C, tile_n), lambda i, j: (i, 0, j)),
            ],
            out_specs=pl.BlockSpec((1, 8, 128), lambda i, j: (i, 0, 0)),
            scratch_shapes=[pltpu.VMEM((tile_b, C, tile_n), jnp.float32)],
        ),
        compiler_params=pltpu.CompilerParams(
            dimension_semantics=("parallel", "arbitrary"),
            vmem_limit_bytes=vmem_limit,
        ),
        cost_estimate=cost,
    )(yp, yt)

    total = jnp.sum(partials[:, 0, 0])       # one scalar per batch tile
    return -total / jnp.float32(n_rows)


def _reference(y_pred, y_true, eps=1e-6):
    p = jax.nn.softmax(y_pred, axis=1)
    pos = -jnp.mean(jnp.sum(y_true * jnp.log(p + eps), axis=1))
    neg = -jnp.mean(jnp.sum((1.0 - y_true) * jnp.log(1.0 - p + eps), axis=1))
    return pos + neg


if __name__ == "__main__":
    key = jax.random.PRNGKey(0)
    k1, k2 = jax.random.split(key)

    B, C, H, W = 2, 4, 16, 16
    y_pred = jax.random.normal(k1, (B, C, H, W), dtype=jnp.float32)
    # y_true is a gaussian-heatmap-style target in [0, 1].
    y_true = jax.random.uniform(k2, (B, C, H, W), dtype=jnp.float32)

    loss = jax.block_until_ready(gaussian_loss(y_pred, y_true))
    ref = jax.block_until_ready(_reference(y_pred, y_true))

    assert np.allclose(np.asarray(loss), np.asarray(ref), rtol=1e-5, atol=1e-5), (
        loss, ref)
    print("KERNEL_OK")
</pallas_src>

<mosaic_0001>
module attributes {stable_mosaic.version = 11 : i64} {
  func.func @_gaussian_loss_kernel(%arg0: i32, %arg1: i32, %arg2: memref<1x4x256xf32, #tpu.memory_space<vmem>>, %arg3: memref<1x4x256xf32, #tpu.memory_space<vmem>>, %arg4: memref<1x8x128xf32, #tpu.memory_space<vmem>>, %arg5: memref<1x4x256xf32, #tpu.memory_space<vmem>>) attributes {dimension_semantics = [#tpu.dimension_semantics<parallel>, #tpu.dimension_semantics<arbitrary>], iteration_bounds = array<i64: 2, 1>, scalar_prefetch = 0 : i64, scratch_operands = 1 : i64, tpu.core_type = #tpu.core_type<tc>, window_params = [{transform_indices = @transform_0, window_bounds = array<i64: 1, 4, 256>}, {transform_indices = @transform_1, window_bounds = array<i64: 1, 4, 256>}, {transform_indices = @transform_2, window_bounds = array<i64: 1, 8, 128>}]} {
    %c0_i32 = arith.constant 0 : i32
    %0 = arith.cmpi eq, %arg1, %c0_i32 : i32
    %1 = arith.extui %0 : i1 to i32
    %c0_i32_0 = arith.constant 0 : i32
    %2 = arith.cmpi ne, %1, %c0_i32_0 : i32
    scf.if %2 {
      %cst_19 = arith.constant 0.000000e+00 : f32
      %34 = vector.broadcast %cst_19 : f32 to vector<1x4x256xf32>
      %c0_20 = arith.constant 0 : index
      %c0_21 = arith.constant 0 : index
      %c0_22 = arith.constant 0 : index
      %35 = vector.load %arg5[%c0_20, %c0_21, %c0_22] : memref<1x4x256xf32, #tpu.memory_space<vmem>>, vector<1x4x256xf32>
      tpu.vector_store %arg5[%c0_20, %c0_21, %c0_22], %34 {strides = array<i32>} : memref<1x4x256xf32, #tpu.memory_space<vmem>>, vector<1x4x256xf32>,
    } else {
    }
    %c0 = arith.constant 0 : index
    %c0_1 = arith.constant 0 : index
    %c0_2 = arith.constant 0 : index
    %3 = vector.load %arg2[%c0, %c0_1, %c0_2] : memref<1x4x256xf32, #tpu.memory_space<vmem>>, vector<1x4x256xf32>
    %c0_3 = arith.constant 0 : index
    %c0_4 = arith.constant 0 : index
    %c0_5 = arith.constant 0 : index
    %4 = vector.load %arg3[%c0_3, %c0_4, %c0_5] : memref<1x4x256xf32, #tpu.memory_space<vmem>>, vector<1x4x256xf32>
    %cst = arith.constant dense<0xFF800000> : vector<1x256xf32>
    %5 = vector.multi_reduction <maximumf>, %3, %cst [1] : vector<1x4x256xf32> to vector<1x256xf32>
    %6 = vector.shape_cast %5 : vector<1x256xf32> to vector<1x1x256xf32>
    %7 = vector.broadcast %6 : vector<1x1x256xf32> to vector<1x4x256xf32>
    %8 = arith.subf %3, %7 : vector<1x4x256xf32>
    %9 = math.exp %8 : vector<1x4x256xf32>
    %cst_6 = arith.constant dense<0.000000e+00> : vector<1x256xf32>
    %10 = vector.multi_reduction <add>, %9, %cst_6 [1] : vector<1x4x256xf32> to vector<1x256xf32>
    %11 = vector.shape_cast %10 : vector<1x256xf32> to vector<1x1x256xf32>
    %12 = tpu.reciprocal %11 : vector<1x1x256xf32> -> vector<1x1x256xf32>
    %13 = vector.broadcast %12 : vector<1x1x256xf32> to vector<1x4x256xf32>
    %14 = arith.mulf %9, %13 : vector<1x4x256xf32>
    %cst_7 = arith.constant 9.99999997E-7 : f32
    %15 = vector.broadcast %cst_7 : f32 to vector<1x4x256xf32>
    %16 = arith.addf %14, %15 : vector<1x4x256xf32>
    %17 = math.log %16 : vector<1x4x256xf32>
    %18 = arith.mulf %4, %17 : vector<1x4x256xf32>
    %cst_8 = arith.constant 1.000000e+00 : f32
    %19 = vector.broadcast %cst_8 : f32 to vector<1x4x256xf32>
    %20 = arith.subf %19, %4 : vector<1x4x256xf32>
    %cst_9 = arith.constant 1.000000e+00 : f32
    %21 = vector.broadcast %cst_9 : f32 to vector<1x4x256xf32>
    %22 = arith.subf %21, %14 : vector<1x4x256xf32>
    %cst_10 = arith.constant 9.99999997E-7 : f32
    %23 = vector.broadcast %cst_10 : f32 to vector<1x4x256xf32>
    %24 = arith.addf %22, %23 : vector<1x4x256xf32>
    %25 = math.log %24 : vector<1x4x256xf32>
    %26 = arith.mulf %20, %25 : vector<1x4x256xf32>
    %27 = arith.addf %18, %26 : vector<1x4x256xf32>
    %c0_11 = arith.constant 0 : index
    %c0_12 = arith.constant 0 : index
    %c0_13 = arith.constant 0 : index
    %28 = vector.load %arg5[%c0_11, %c0_12, %c0_13] : memref<1x4x256xf32, #tpu.memory_space<vmem>>, vector<1x4x256xf32>
    %29 = arith.addf %28, %27 : vector<1x4x256xf32>
    %c0_14 = arith.constant 0 : index
    %c0_15 = arith.constant 0 : index
    %c0_16 = arith.constant 0 : index
    %30 = vector.load %arg5[%c0_14, %c0_15, %c0_16] : memref<1x4x256xf32, #tpu.memory_space<vmem>>, vector<1x4x256xf32>
    tpu.vector_store %arg5[%c0_14, %c0_15, %c0_16], %29 {strides = array<i32>} : memref<1x4x256xf32, #tpu.memory_space<vmem>>, vector<1x4x256xf32>,
    %c0_i32_17 = arith.constant 0 : i32
    %31 = arith.cmpi eq, %arg1, %c0_i32_17 : i32
    %32 = arith.extui %31 : i1 to i32
    %c0_i32_18 = arith.constant 0 : i32
    %33 = arith.cmpi ne, %32, %c0_i32_18 : i32
    scf.if %33 {
      %c0_19 = arith.constant 0 : index
      %c0_20 = arith.constant 0 : index
      %c0_21 = arith.constant 0 : index
      %34 = vector.load %arg5[%c0_19, %c0_20, %c0_21] : memref<1x4x256xf32, #tpu.memory_space<vmem>>, vector<1x4x256xf32>
      %35 = vector.shape_cast %34 : vector<1x4x256xf32> to vector<1x1x4x256xf32>
      %cst_22 = arith.constant dense<0.000000e+00> : vector<1xf32>
      %36 = vector.multi_reduction <add>, %35, %cst_22 [1, 2, 3] : vector<1x1x4x256xf32> to vector<1xf32>
      %37 = vector.shape_cast %36 : vector<1xf32> to vector<1x1x1x1xf32>
      %38 = vector.extract %37[0, 0, 0, 0] : f32 from vector<1x1x1x1xf32>
      %39 = vector.broadcast %38 : f32 to vector<1x8x128xf32>
      %c0_23 = arith.constant 0 : index
      %c0_24 = arith.constant 0 : index
      %c0_25 = arith.constant 0 : index
      %40 = vector.load %arg4[%c0_23, %c0_24, %c0_25] : memref<1x8x128xf32, #tpu.memory_space<vmem>>, vector<1x8x128xf32>
      tpu.vector_store %arg4[%c0_23, %c0_24, %c0_25], %39 {strides = array<i32>} : memref<1x8x128xf32, #tpu.memory_space<vmem>>, vector<1x8x128xf32>,
    } else {
    }
    return
  }
  func.func @transform_0(%arg0: i32, %arg1: i32) -> (i32, i32, i32) {
    %c0_i32 = arith.constant 0 : i32
    %c0_i32_0 = arith.constant 0 : i32
    return %arg0, %c0_i32, %arg1 : i32, i32, i32
  }
  func.func @transform_1(%arg0: i32, %arg1: i32) -> (i32, i32, i32) {
    %c0_i32 = arith.constant 0 : i32
    %c0_i32_0 = arith.constant 0 : i32
    return %arg0, %c0_i32, %arg1 : i32, i32, i32
  }
  func.func @transform_2(%arg0: i32, %arg1: i32) -> (i32, i32, i32) {
    %c0_i32 = arith.constant 0 : i32
    %c0_i32_0 = arith.constant 0 : i32
    %c0_i32_1 = arith.constant 0 : i32
    return %arg0, %c0_i32, %c0_i32_0 : i32, i32, i32
  }
}

</mosaic_0001>

<llo_original>
// kernel: tpu_custom_call.1
$region0: #{tpu_custom_call.1}
  #allocation0 [shape = 'u32[]', space=smem, size = 0x4, offset = 0x4, fixed_abs, tag = 'smem constant byte address 0x4 - core index']
  #allocation1 [shape = 'u32[144,128]{1,0:T(1,128)}', space=vmem, size = 0x12000, scoped, tag = 'internal scratch']
  #allocation2 [shape = 'f32[1,4,256]{2,1,0:T(4,128)}', space=vmem, size = 0x1000, scoped, tag = 'scratch operand']
  %s0 = inlined_call_operand.hbm [shape: f32[2,4,256], index: 0, kind: input, shape index: {}]
  %s1 = inlined_call_operand.hbm [shape: f32[2,4,256], index: 1, kind: input, shape index: {}]
  %s2 = inlined_call_operand.hbm [shape: f32[2,8,128], index: 2, kind: output, shape index: {}]
  %s3 = sld [smem:[#allocation0]]
  $region57: #{tpu_custom_call.1} parent=0
    _
  %s5 = ssub.s32 1, %s3
  %s6 = scalar_select 0, %s5, %s3
  $region1: #{tpu_custom_call.1} parent=0
    #allocation3 [shape = 'u8[8192]{0}', space=vmem, size = 0x2000, scoped, tag = 'input window, operand 0']
    #allocation4 [shape = 's32[2]{0}', space=sflag, size = 0x8, scoped, tag = 'scoped memory for tpu_custom_call.1']
    #allocation5 [shape = 's32[2]{0}', space=sflag, size = 0x8, scoped, tag = 'scoped memory for tpu_custom_call.1']
    #allocation6 [shape = 'u8[8192]{0}', space=vmem, size = 0x2000, scoped, tag = 'input window, operand 1']
    #allocation7 [shape = 's32[2]{0}', space=sflag, size = 0x8, scoped, tag = 'scoped memory for tpu_custom_call.1']
    #allocation8 [shape = 'u8[8192]{0}', space=vmem, size = 0x2000, scoped, tag = 'output window, operand 0']
    %7 = vsyncpa [#allocation4], 0
    %s8 = scalar_lea.sflag [#allocation4], 1
    %9 = vsyncpa %s8, 0
    %10 = vsyncpa [#allocation7], 0
    %s11 = scalar_lea.sflag [#allocation7], 1
    %12 = vsyncpa %s11, 0
    %13 = vsyncpa [#allocation5], 0
    %s14 = scalar_lea.sflag [#allocation5], 1
    %15 = vsyncpa %s14, 0
    loop: start=0, step=1, limit=4
    $region2: #{tpu_custom_call.1} parent=1 // loop_pre_header
      _
    $region3: #{tpu_custom_call.1} parent=1 // loop_header
      %s17 = sphi 0, %s21
      %p18 = scmp.ge.s32.totalorder %s17, 4
      %s24 = sphi 0, %s36
      %s25 = sphi 0, %s32
      %s26 = sphi 0, %s24
      %s27 = sphi 0, %s25
      %s28 = sphi 0, %s26
      %s29 = sphi 0, %s27
      %s41 = sphi 0, %s43
      %s44 = sphi 0, %s41
      %s45 = sphi 0, %s44
      %s61 = sphi 0, %s45
      %s69 = sphi 0, %s71
      %s72 = sphi 0, %s69
      %s73 = sphi 0, %s72
      %s89 = sphi 0, %s73
      %s95 = sphi 0, %s97
      %s98 = sphi 0, %s95
      %s99 = sphi 0, %s98
      %s115 = sphi 0, %s99
    $region4: #{tpu_custom_call.1} parent=1 // loop_header_branch
      %20 = sbr.rel (%p18) target = $region8
    $region5: #{tpu_custom_call.1} parent=1 // loop_body
      %s22 = ssub.s32 %s17, 1
      %s23 = ssub.s32 %s17, 2
      %s30 = sadd.s32 1, %s25
      %p31 = scmp.ge.s32.totalorder %s30, 1
      %s32 = scalar_select %p31, 0, %s30
      %s33 = sadd.s32 1, %s24
      %s34 = scalar_select %p31, %s33, %s24
      %p35 = scmp.ge.s32.totalorder %s34, 2
      %s36 = scalar_select %p35, 0, %s34
      %s37 = ssub.s32 %s24, %s36
      %s38 = ssub.s32 %s25, %s32
      %s39 = sor.u32 %s37, %s38
      %p40 = scmp.eq.s32.totalorder %s39, 0
      %s42 = sadd.s32 %s41, 1
      %s43 = scalar_select %p40, %s41, %s42
      %p46 = pneg %p40
      %p47 = scmp.eq.s32.totalorder %s17, 1
      %p48 = por %p46, %p47
      %p49 = scmp.ne.s32.totalorder %s41, %s44
      %p50 = scmp.eq.s32.totalorder %s17, 0
      %p51 = por %p49, %p50
      %p52 = scmp.ne.s32.totalorder %s41, %s44
      %p53 = scmp.eq.s32.totalorder %s22, 1
      %p54 = por %p52, %p53
      %p55 = scmp.ne.s32.totalorder %s44, %s45
      %p56 = scmp.eq.s32.totalorder %s22, 0
      %p57 = por %p55, %p56
      %p58 = scmp.ne.s32.totalorder %s44, %s45
      %p59 = scmp.eq.s32.totalorder %s23, 1
      %p60 = por %p58, %p59
      %p62 = scmp.ne.s32.totalorder %s45, %s61
      %p63 = scmp.eq.s32.totalorder %s23, 0
      %p64 = por %p62, %p63
      %s65 = ssub.s32 %s24, %s36
      %s66 = ssub.s32 %s25, %s32
      %s67 = sor.u32 %s65, %s66
      %p68 = scmp.eq.s32.totalorder %s67, 0
      %s70 = sadd.s32 %s69, 1
      %s71 = scalar_select %p68, %s69, %s70
      %p74 = pneg %p68
      %p75 = scmp.eq.s32.totalorder %s17, 1
      %p76 = por %p74, %p75
      %p77 = scmp.ne.s32.totalorder %s69, %s72
      %p78 = scmp.eq.s32.totalorder %s17, 0
      %p79 = por %p77, %p78
      %p80 = scmp.ne.s32.totalorder %s69, %s72
      %p81 = scmp.eq.s32.totalorder %s22, 1
      %p82 = por %p80, %p81
      %p83 = scmp.ne.s32.totalorder %s72, %s73
      %p84 = scmp.eq.s32.totalorder %s22, 0
      %p85 = por %p83, %p84
      %p86 = scmp.ne.s32.totalorder %s72, %s73
      %p87 = scmp.eq.s32.totalorder %s23, 1
      %p88 = por %p86, %p87
      %p90 = scmp.ne.s32.totalorder %s73, %s89
      %p91 = scmp.eq.s32.totalorder %s23, 0
      %p92 = por %p90, %p91
      %s93 = ssub.s32 %s24, %s36
      %p94 = scmp.eq.s32.totalorder %s93, 0
      %s96 = sadd.s32 %s95, 1
      %s97 = scalar_select %p94, %s95, %s96
      %p100 = pneg %p94
      %p101 = scmp.eq.s32.totalorder %s17, 1
      %p102 = por %p100, %p101
      %p103 = scmp.ne.s32.totalorder %s95, %s98
      %p104 = scmp.eq.s32.totalorder %s17, 0
      %p105 = por %p103, %p104
      %p106 = scmp.ne.s32.totalorder %s95, %s98
      %p107 = scmp.eq.s32.totalorder %s22, 1
      %p108 = por %p106, %p107
      %p109 = scmp.ne.s32.totalorder %s98, %s99
      %p110 = scmp.eq.s32.totalorder %s22, 0
      %p111 = por %p109, %p110
      %p112 = scmp.ne.s32.totalorder %s98, %s99
      %p113 = scmp.eq.s32.totalorder %s23, 1
      %p114 = por %p112, %p113
      %p116 = scmp.ne.s32.totalorder %s99, %s115
      %p117 = scmp.eq.s32.totalorder %s23, 0
      %p118 = por %p116, %p117
      %p119 = scmp.le.s32.totalorder 1, %s17
      %p120 = scmp.lt.s32.totalorder %s17, 3
      %p121 = pnand %p119, %p120
      %p122 = pneg %p121
      // Predicated region
      $region9: #{tpu_custom_call.1} parent=5 // pred_check
        _
      $region10: #{tpu_custom_call.1} parent=5 // pred_check_branch
        %124 = sbr.rel (%p121) target = $region12
      $region11: #{tpu_custom_call.1} parent=5 // pred_region
        %s125 = ssub.s32 %s17, 1
      $region12: #{tpu_custom_call.1} parent=5 // pred_fallthru
        _
      %p126 = scmp.lt.s32.totalorder %s17, 2
      // Predicated region
      $region13: #{tpu_custom_call.1} parent=5 // pred_check
        %p127 = pneg %p126
      $region14: #{tpu_custom_call.1} parent=5 // pred_check_branch
        %129 = sbr.rel (%p127) target = $region16
      $region15: #{tpu_custom_call.1} parent=5 // pred_region
        // Predicated region
        $region17: #{tpu_custom_call.1} parent=15 // pred_check
          %p130 = pneg %p51
        $region18: #{tpu_custom_call.1} parent=15 // pred_check_branch
          %132 = sbr.rel (%p130) target = $region20
        $region19: #{tpu_custom_call.1} parent=15 // pred_region
          %s133 = sand.u32 %s41, 1
          %s134 = scalar_lea.sflag [#allocation4], %s133
          %s135 = sand.u32 %s41, 1
          %s136 = smul.addr %s135, 8
          %s137 = scalar_lea.vmem [#allocation3], %s136
          %s138 = smul.u32 2, %s25
          %s140 = ssub.s32 128, 128
          %141 = vsyncadd %s134, %s140
          %s142 = smul.addr %s24, 2
          %s143 = sadd.s32 %s138, %s142
          %s144 = smul.addr %s143, 64
          %s145 = scalar_lea.hbm %s0, %s144
          %s147 = sshll.u32 %s137, 4
          %s148 = int_to_ptr.vmem [resolvable:$true] %s147
          %150 = dma.hbm_to_vmem [thread:$0]  %s145, 128, %s148, %s134
        $region20: #{tpu_custom_call.1} parent=15 // pred_fallthru
          _
        // Predicated region
        $region21: #{tpu_custom_call.1} parent=15 // pred_check
          %p151 = pneg %p79
        $region22: #{tpu_custom_call.1} parent=15 // pred_check_branch
          %153 = sbr.rel (%p151) target = $region24
        $region23: #{tpu_custom_call.1} parent=15 // pred_region
          %s154 = sand.u32 %s69, 1
          %s155 = scalar_lea.sflag [#allocation7], %s154
          %s156 = sand.u32 %s69, 1
          %s157 = smul.addr %s156, 8
          %s158 = scalar_lea.vmem [#allocation6], %s157
          %s159 = smul.u32 2, %s25
          %s161 = ssub.s32 128, 128
          %162 = vsyncadd %s155, %s161
          %s163 = smul.addr %s24, 2
          %s164 = sadd.s32 %s159, %s163
          %s165 = smul.addr %s164, 64
          %s166 = scalar_lea.hbm %s1, %s165
          %s168 = sshll.u32 %s158, 4
          %s169 = int_to_ptr.vmem [resolvable:$true] %s168
          %171 = dma.hbm_to_vmem [thread:$0]  %s166, 128, %s169, %s155
        $region24: #{tpu_custom_call.1} parent=15 // pred_fallthru
          _
      $region16: #{tpu_custom_call.1} parent=5 // pred_fallthru
        _
      %p172 = scmp.le.s32.totalorder 1, %s17
      %p173 = scmp.lt.s32.totalorder %s17, 3
      %p174 = pnand %p172, %p173
      %p175 = pneg %p174
      // Predicated region
      $region25: #{tpu_custom_call.1} parent=5 // pred_check
        _
      $region26: #{tpu_custom_call.1} parent=5 // pred_check_branch
        %177 = sbr.rel (%p174) target = $region28
      $region27: #{tpu_custom_call.1} parent=5 // pred_region
        %s178 = ssub.s32 %s17, 1
        %s179 = sand.u32 %s44, 1
        %s180 = scalar_lea.sflag [#allocation4], %s179
        %s181 = sand.u32 %s44, 1
        %s182 = smul.addr %s181, 8
        %s183 = scalar_lea.vmem [#allocation3], %s182
        // Predicated region
        $region29: #{tpu_custom_call.1} parent=27 // pred_check
          %p184 = pneg %p57
        $region30: #{tpu_custom_call.1} parent=27 // pred_check_branch
          %186 = sbr.rel (%p184) target = $region32
        $region31: #{tpu_custom_call.1} parent=27 // pred_region
          %187 = dma.done %s180, 128
        $region32: #{tpu_custom_call.1} parent=27 // pred_fallthru
          _
        %s188 = sand.u32 %s72, 1
        %s189 = scalar_lea.sflag [#allocation7], %s188
        %s190 = sand.u32 %s72, 1
        %s191 = smul.addr %s190, 8
        %s192 = scalar_lea.vmem [#allocation6], %s191
        // Predicated region
        $region33: #{tpu_custom_call.1} parent=27 // pred_check
          %p193 = pneg %p85
        $region34: #{tpu_custom_call.1} parent=27 // pred_check_branch
          %195 = sbr.rel (%p193) target = $region36
        $region35: #{tpu_custom_call.1} parent=27 // pred_region
          %196 = dma.done %s189, 128
        $region36: #{tpu_custom_call.1} parent=27 // pred_fallthru
          _
        %s197 = sand.u32 %s44, 1
        %s198 = scalar_lea.sflag [#allocation4], %s197
        %s199 = sand.u32 %s44, 1
        %s200 = smul.addr %s199, 8
        %s201 = scalar_lea.vmem [#allocation3], %s200
        %p202 = pneg %p57
        %p203 = pneg %p54
        %s204 = sand.u32 %s72, 1
        %s205 = scalar_lea.sflag [#allocation7], %s204
        %s206 = sand.u32 %s72, 1
        %s207 = smul.addr %s206, 8
        %s208 = scalar_lea.vmem [#allocation6], %s207
        %p209 = pneg %p85
        %p210 = pneg %p82
        %p211 = pneg %p111
        %p212 = pneg %p108
        %s213 = sand.u32 %s98, 1
        %s214 = scalar_lea.sflag [#allocation5], %s213
        %s215 = sand.u32 %s98, 1
        %s216 = smul.addr %s215, 8
        %s217 = scalar_lea.vmem [#allocation8], %s216
        %s218 = smul.u32 2, %s27
        %s219 = smul.u32 2, %s27
        %p220 = scmp.eq.s32.totalorder %s27, 0
        // Predicated region
        $region37: #{tpu_custom_call.1} parent=27 // pred_check
          %p221 = pneg %p220
        $region38: #{tpu_custom_call.1} parent=27 // pred_check_branch
          %223 = sbr.rel (%p221) target = $region40
        $region39: #{tpu_custom_call.1} parent=27 // pred_region
          %224 = vst [vmem:[#allocation2] sm:$0xff] 0.0
        $region40: #{tpu_custom_call.1} parent=27 // pred_fallthru
          _
        %v225 = vld [vmem:[%s183] sm:$0xff]
        %v226 = vld [vmem:[%s192] sm:$0xff]
        %v228 = vcombine.high %v225, %v225
        %vm230 = vcmask 1043456
        %v231 = vsel %vm230, %v225, -inf
        %v232 = vrot.slane %v231, 4
        %v233 = vmax.f32 %v231, %v232
        %v234 = vrot.slane %v233, 2
        %v235 = vmax.f32 %v233, %v234
        %v236 = vrot.slane %v235, 1
        %v237 = vmax.f32 %v235, %v236
        %v238 = vsel %vm230, %v228, -inf
        %v239 = vrot.slane %v238, 4
        %v240 = vmax.f32 %v238, %v239
        %v241 = vrot.slane %v240, 2
        %v242 = vmax.f32 %v240, %v241
        %v243 = vrot.slane %v242, 1
        %v244 = vmax.f32 %v242, %v243
        %v247 = vcombine.low %v237, %v244
        %v249 = vsub.f32 %v225, %v247
        %v250 = vmul.f32 %v249, 1.442695
        %v251 = vpow.pop %v250
        %v253 = vcombine.high %v251, %v251
        %v255 = vsel %vm230, %v251, 0.0
        %v256 = vrot.slane %v255, 4
        %v257 = vadd.f32 %v255, %v256
        %v258 = vrot.slane %v257, 2
        %v259 = vadd.f32 %v257, %v258
        %v260 = vrot.slane %v259, 1
        %v261 = vadd.f32 %v259, %v260
        %v262 = vsel %vm230, %v253, 0.0
        %v263 = vrot.slane %v262, 4
        %v264 = vadd.f32 %v262, %v263
        %v265 = vrot.slane %v264, 2
        %v266 = vadd.f32 %v264, %v265
        %v267 = vrot.slane %v266, 1
        %v268 = vadd.f32 %v266, %v267
        %v269 = vrcp.pop %v261
        %v270 = vrcp.pop %v268
        %v273 = vcombine.low %v269, %v270
        %v275 = vmul.f32 %v251, %v273
        %v276 = vadd.f32 %v275, 1e-06
        %v277 = vlog2.pop %v276
        %v278 = vmul.f32 %v277, 0.6931472
        %v279 = vmul.f32 %v226, %v278
        %v280 = vsub.f32 1.0, %v226
        %v281 = vsub.f32 1.0, %v275
        %v282 = vadd.f32 %v281, 1e-06
        %v283 = vlog2.pop %v282
        %v284 = vmul.f32 %v283, 0.6931472
        %v285 = vmul.f32 %v280, %v284
        %v286 = vadd.f32 %v279, %v285
        %v287 = vld [vmem:[#allocation2] sm:$0xff]
        %v288 = vadd.f32 %v287, %v286
        %289 = vst [vmem:[#allocation2] sm:$0xff] %v288
        // Predicated region
        $region41: #{tpu_custom_call.1} parent=27 // pred_check
          %p290 = pneg %p220
        $region42: #{tpu_custom_call.1} parent=27 // pred_check_branch
          %292 = sbr.rel (%p290) target = $region44
        $region43: #{tpu_custom_call.1} parent=27 // pred_region
          %v293 = vld [vmem:[#allocation2] sm:$0xff]
          %v295 = vcombine.high %v293, %v293
          %v297 = vsel %vm230, %v293, 0.0
          %v298 = vsel %vm230, %v295, 0.0
          %v299 = vadd.f32 %v297, %v298
          %300 = vadd.xlane.f32.xlu0 %v299
          %v301 = vpop.xlane.xlu0 %300
          %v302 = vrot.slane %v301, 4
          %v303 = vadd.f32 %v301, %v302
          %v304 = vrot.slane %v303, 2
          %v305 = vadd.f32 %v303, %v304
          %v306 = vrot.slane %v305, 1
          %v307 = vadd.f32 %v305, %v306
          %s308 = vtos %v307
          %v309 = vstv %s308
          %310 = vst [vmem:[%s217] sm:$0xff] %v309
        $region44: #{tpu_custom_call.1} parent=27 // pred_fallthru
          _
        %s311 = sand.u32 %s98, 1
        %s312 = scalar_lea.sflag [#allocation5], %s311
        %s313 = sand.u32 %s98, 1
        %s314 = smul.addr %s313, 8
        %s315 = scalar_lea.vmem [#allocation8], %s314
        // Predicated region
        $region45: #{tpu_custom_call.1} parent=27 // pred_check
          %p316 = pneg %p108
        $region46: #{tpu_custom_call.1} parent=27 // pred_check_branch
          %318 = sbr.rel (%p316) target = $region48
        $region47: #{tpu_custom_call.1} parent=27 // pred_region
          %s320 = ssub.s32 128, 128
          %321 = vsyncadd %s312, %s320
          %s322 = smul.addr %s26, 128
          %s323 = scalar_lea.hbm %s2, %s322
          %s325 = sshll.u32 %s315, 4
          %s326 = int_to_ptr.vmem [resolvable:$true] %s325
          %328 = dma.vmem_to_hbm [thread:$0]  %s326, 128, %s323, %s312
        $region48: #{tpu_custom_call.1} parent=27 // pred_fallthru
          _
      $region28: #{tpu_custom_call.1} parent=5 // pred_fallthru
        _
      %p329 = scmp.le.s32.totalorder 2, %s17
      // Predicated region
      $region49: #{tpu_custom_call.1} parent=5 // pred_check
        %p330 = pneg %p329
      $region50: #{tpu_custom_call.1} parent=5 // pred_check_branch
        %332 = sbr.rel (%p330) target = $region52
      $region51: #{tpu_custom_call.1} parent=5 // pred_region
        %s333 = ssub.s32 %s17, 2
        // Predicated region
        $region53: #{tpu_custom_call.1} parent=51 // pred_check
          %p334 = pneg %p114
        $region54: #{tpu_custom_call.1} parent=51 // pred_check_branch
          %336 = sbr.rel (%p334) target = $region56
        $region55: #{tpu_custom_call.1} parent=51 // pred_region
          %s337 = sand.u32 %s99, 1
          %s338 = scalar_lea.sflag [#allocation5], %s337
          %s339 = sand.u32 %s99, 1
          %s340 = smul.addr %s339, 8
          %s341 = scalar_lea.vmem [#allocation8], %s340
          %342 = dma.done %s338, 128
        $region56: #{tpu_custom_call.1} parent=51 // pred_fallthru
          _
      $region52: #{tpu_custom_call.1} parent=5 // pred_fallthru
        _
    $region6: #{tpu_custom_call.1} parent=1 // loop_footer
      %s21 = sadd.s32 1, %s17
    $region7: #{tpu_custom_call.1} parent=1 // loop_footer_branch
      %16 = sbr.rel target = $region3
    $region8: #{tpu_custom_call.1} parent=1 // loop_exit
      _
    %343 = vsyncpa [#allocation4], 1
    %s344 = scalar_lea.sflag [#allocation4], 1
    %345 = vsyncpa %s344, 1
    %346 = vsyncpa [#allocation7], 1
    %s347 = scalar_lea.sflag [#allocation7], 1
    %348 = vsyncpa %s347, 1
    %349 = vsyncpa [#allocation5], 1
    %s350 = scalar_lea.sflag [#allocation5], 1
    %351 = vsyncpa %s350, 1

</llo_original>
